<compile_context>
chip_gen: v7x
topology: tpu7x:2x2x1
jax: 0.10.0
libtpu: 0.0.40
codegen_flags: <defaults>
</compile_context>

<pallas_src>
import functools

import jax
import jax.numpy as jnp
import numpy as np
from jax import lax
from jax.experimental import pallas as pl
from jax.experimental.pallas import tpu as pltpu


def _round_up(x, m):
    return ((x + m - 1) // m) * m


def _carried_width(min_w, chans, lane=128):
    """Smallest width >= min_w whose lane count width*chans is a multiple of 128."""
    w = max(min_w, 1)
    while (w * chans) % lane:
        w += 1
    return w


# ----------------------------- host-side constant builders --------------------


def _np_band_mask(k, w_in, w_out, in_stride, n_valid):
    """(K, w_in, w_out) 0/1 mask: input col w feeds output col wo through kernel
    col kw iff w == in_stride*(wo+kw) and the source column index wo+kw < n_valid.
    in_stride=2 fuses the preceding 1x2 max-pool column *selection* into the conv."""
    kw = np.arange(k)[:, None, None]
    w = np.arange(w_in)[None, :, None]
    wo = np.arange(w_out)[None, None, :]
    src = wo + kw
    return ((w == in_stride * src) & (src < n_valid)).astype(np.float32)


def _banded_weights(w_oihw, w_in, w_out, in_stride, n_valid):
    """(K, w_in*Cin, w_out*Cout) banded matrices for a KxK VALID conv.  Rows /
    lanes are laid out (col, channel) with channel fastest.  Only the tiny weight
    einsum is traced; the mask is a numpy (compile-time) constant."""
    cout, cin, k, _ = w_oihw.shape
    mask = jnp.asarray(_np_band_mask(k, w_in, w_out, in_stride, n_valid))
    w_hwio = jnp.transpose(w_oihw, (2, 3, 1, 0)).astype(jnp.float32)   # (KH,KW,Cin,Cout)
    band = jnp.einsum("xwo,hxic->hwioc", mask, w_hwio)                 # (KH,w_in,Cin,w_out,Cout)
    return band.reshape(k, w_in * cin, w_out * cout)


# --------------------------------- fused kernel -------------------------------


def _lenet_kernel(xs_ref, w_ref, o_ref, *, k, c1, c2,
                  wb1_rows, b1_row, wb2_row0, wb2_rows, b2_row):
    """Fused conv+ReLU+pool (x2) for the whole batch; everything stays in VMEM.
    4 MXU dots total; all pooling / row-shifting is XLU rolls + VPU maximums."""
    f32 = jnp.float32

    def dot(a, b):
        return jnp.dot(a, b, preferred_element_type=f32)

    def shift_up(x, n, axis):
        # result[i] = x[(i + n) % size]   (pltpu.roll follows jnp.roll semantics)
        size = x.shape[axis]
        return pltpu.roll(x, shift=(size - n) % size, axis=axis)

    # ---- conv1 + bias + ReLU: ONE MXU dot (kernel rows im2col'd on the host) --
    y1 = dot(xs_ref[...], w_ref[0:wb1_rows, :]) + w_ref[b1_row:b1_row + 1, :]
    y1 = jnp.maximum(y1, 0.0)                       # rows=(b, h), lanes=(w, c1)

    # ---- maxpool 2x2/2 #1 as pairwise maxes (exact, XLU rolls). The every-2nd
    #      row/col *selection* is deferred: columns fold into conv2's stride-2
    #      bands, rows are absorbed by conv2's stride-2 row shifts / host crop.
    p1 = jnp.maximum(y1, shift_up(y1, 1, 0))        # max(row h, h+1)
    p1 = jnp.maximum(p1, shift_up(p1, c1, 1))       # max(col w, w+1); pooled (j,pw)
    #                                                 value now sits at (2j, 2*pw*c1+c)

    # ---- conv2 + bias + ReLU: K independent dots; the per-kernel-row shift is a
    #      stride-2 sublane roll of each partial product (off the MXU path).
    acc = dot(p1, w_ref[wb2_row0:wb2_row0 + wb2_rows, :])
    for kh in range(1, k):
        lo = wb2_row0 + kh * wb2_rows
        acc = acc + shift_up(dot(p1, w_ref[lo:lo + wb2_rows, :]), 2 * kh, 0)
    y2 = jnp.maximum(acc + w_ref[b2_row:b2_row + 1, :], 0.0)   # rows=(b, 2*ho), lanes=(wo, c2)

    # ---- maxpool 2x2/2 #2 as pairwise maxes; valid results land at rows 4*ph2,
    #      lanes 2*pw2*c2+c; the host crops them (store stays lane-dense).
    p2 = jnp.maximum(y2, shift_up(y2, 2, 0))
    p2 = jnp.maximum(p2, shift_up(p2, c2, 1))
    o_ref[...] = p2.astype(o_ref.dtype)             # single lane-dense store


# --------------------------------- forward ------------------------------------


def lenet_forward(x_nchw, w1_oihw, b1, w2_oihw, b2):
    """LeNet.forward (padding=0, stride 1, is_bn=False, dropout identity)."""
    B, C0, H, W = x_nchw.shape
    C1, _, K, _ = w1_oihw.shape
    C2 = w2_oihw.shape[0]
    f32 = jnp.float32

    # Geometry: VALID conv, floor-mode 2x2/2 pools.
    Ho1, Wo1 = H - K + 1, W - K + 1
    Hp1, Wp1 = Ho1 // 2, Wo1 // 2
    Ho2, Wo2 = Hp1 - K + 1, Wp1 - K + 1
    Hp2, Wp2 = Ho2 // 2, Wo2 // 2
    assert Ho2 > 0 and Hp2 > 0 and Wp2 > 0, "input too small for two conv+pool stages"

    # Carried (padded) geometry: one B*Hc1-row frame is kept through the whole
    # kernel; lanes are kept 128-dense through both stages.
    Hc1 = _round_up(Ho1, 8)                  # carried rows per image
    Hin1 = Hc1 + K - 1                       # zero-padded input rows
    Wc1 = _carried_width(Wo1, C1)            # carried conv1 cols -> Wc1*C1 lanes
    Wc2 = _carried_width(2 * Wp2, C2)        # carried conv2 cols -> Wc2*C2 lanes
    L = Wc1 * C1
    assert L == Wc2 * C2, "stage lane widths must match for the packed weight buffer"
    # Deepest stage-1 row/col ever read for a *kept* output stays inside the
    # valid conv-1 output and inside each image's carried block (no roll wrap).
    assert 4 * Hp2 + 2 * K - 3 <= min(Hc1, Ho1) - 1
    assert 4 * Wp2 + 2 * K - 3 <= min(Wc1, Wo1) - 1

    # -------- host/XLA-side prep (band masks are compile-time numpy constants) --
    x = jnp.transpose(x_nchw, (0, 2, 3, 1)).astype(f32)            # NCHW -> NHWC
    x = x.reshape(B, H, W * C0)                                     # lanes = (w, ci)
    x = jnp.pad(x, ((0, 0), (0, Hin1 - H), (0, 0)))
    xs_cat = jnp.concatenate(                                        # (B*Hc1, K*W*C0)
        [x[:, kh:kh + Hc1, :].reshape(B * Hc1, W * C0) for kh in range(K)], axis=1)

    wb1 = _banded_weights(w1_oihw, W, Wc1, 1, W).reshape(K * W * C0, L)
    # conv2 bands read the pooled activations straight off the stage-1 lane layout:
    # stride-2 column bands == fused 1x2 max-pool column selection.
    wb2 = _banded_weights(w2_oihw, Wc1, Wc2, 2, Wp1).reshape(K * Wc1 * C1, L)
    b1row = jnp.tile(b1.astype(f32), Wc1).reshape(1, L)
    b2row = jnp.tile(b2.astype(f32), Wc2).reshape(1, L)

    # Pack every weight-derived operand into ONE 128-lane buffer (1 DMA).
    parts, offs, row = [], {}, 0

    def _add(name, arr):
        nonlocal row
        pad = (-row) % 8                       # keep every segment 8-row aligned
        if pad:
            parts.append(jnp.zeros((pad, L), f32))
            row += pad
        offs[name] = row
        parts.append(arr)
        row += arr.shape[0]

    _add("wb1", wb1)
    _add("b1", b1row)
    _add("wb2", wb2)
    _add("b2", b2row)
    tail = (-row) % 8
    if tail:
        parts.append(jnp.zeros((tail, L), f32))
    wbuf = jnp.concatenate(parts, axis=0)

    kernel = functools.partial(
        _lenet_kernel, k=K, c1=C1, c2=C2,
        wb1_rows=K * W * C0, b1_row=offs["b1"],
        wb2_row0=offs["wb2"], wb2_rows=Wc1 * C1, b2_row=offs["b2"])

    vmem = pl.BlockSpec(memory_space=pltpu.MemorySpace.VMEM)
    out2d = pl.pallas_call(
        kernel,
        out_shape=jax.ShapeDtypeStruct((B * Hc1, L), f32),
        in_specs=[vmem, vmem],
        out_specs=vmem,
    )(xs_cat, wbuf)

    # Valid pooled-2 outputs sit at rows 4*ph2 and column blocks 2*pw2 of the
    # carried frame; crop + PyTorch NCHW flatten (x.view(B, -1)) on the host.
    out = out2d.reshape(B, Hc1, Wc2, C2)[:, :4 * Hp2:4, :2 * Wp2:2, :]
    return jnp.transpose(out, (0, 3, 1, 2)).reshape(B, -1)


# --------------------------------- reference -----------------------------------


def ref_forward(x_nchw, w1_oihw, b1, w2_oihw, b2):
    """Pure-JAX reference matching the PyTorch forward (is_bn=False, p=0)."""
    def block(x, w, b):
        y = lax.conv_general_dilated(x, w, (1, 1), "VALID",
                                     dimension_numbers=("NCHW", "OIHW", "NCHW"))
        y = jnp.maximum(y + b[None, :, None, None], 0.0)
        return lax.reduce_window(y, -jnp.inf, lax.max,
                                 (1, 1, 2, 2), (1, 1, 2, 2), "VALID")
    y = block(x_nchw, w1_oihw, b1)
    y = block(y, w2_oihw, b2)
    return y.reshape(y.shape[0], -1)


if __name__ == "__main__":
    # Module hyperparameters: d_kv=16 (spatial), size_c=4 (in channels),
    # kernel=3, hidden_kernel=8, out_kernel=8, padding=0, is_bn=False.
    B, size_c, d_kv = 2, 4, 16
    ksz, hidden_kernel, out_kernel = 3, 8, 8

    key = jax.random.PRNGKey(0)
    kx, kw1, kb1, kw2, kb2 = jax.random.split(key, 5)
    x = jax.random.normal(kx, (B, size_c, d_kv, d_kv), jnp.float32)
    w1 = 0.1 * jax.random.normal(kw1, (hidden_kernel, size_c, ksz, ksz), jnp.float32)
    b1 = 0.1 * jax.random.normal(kb1, (hidden_kernel,), jnp.float32)
    w2 = 0.1 * jax.random.normal(kw2, (out_kernel, hidden_kernel, ksz, ksz), jnp.float32)
    b2 = 0.1 * jax.random.normal(kb2, (out_kernel,), jnp.float32)

    fwd = jax.jit(lenet_forward)
    out = jax.block_until_ready(fwd(x, w1, b1, w2, b2))
    ref = jax.block_until_ready(ref_forward(x, w1, b1, w2, b2))

    assert out.shape == (B, out_kernel * 2 * 2), out.shape
    np.testing.assert_allclose(np.asarray(out), np.asarray(ref), rtol=1e-4, atol=1e-4)
    print("KERNEL_OK")
</pallas_src>

<mosaic_0001>
module attributes {stable_mosaic.version = 11 : i64} {
  func.func @_lenet_kernel(%arg0: memref<32x192xf32, #tpu.memory_space<vmem>>, %arg1: memref<592x128xf32, #tpu.memory_space<vmem>>, %arg2: memref<32x128xf32, #tpu.memory_space<vmem>>) attributes {dimension_semantics = [], scalar_prefetch = 0 : i64, scratch_operands = 0 : i64, tpu.core_type = #tpu.core_type<tc>} {
    %c0 = arith.constant 0 : index
    %c0_0 = arith.constant 0 : index
    %0 = vector.load %arg0[%c0, %c0_0] : memref<32x192xf32, #tpu.memory_space<vmem>>, vector<32x192xf32>
    %c0_1 = arith.constant 0 : index
    %c0_2 = arith.constant 0 : index
    %1 = vector.load %arg1[%c0_1, %c0_2] : memref<592x128xf32, #tpu.memory_space<vmem>>, vector<192x128xf32>
    %cst = arith.constant dense<0.000000e+00> : vector<32x128xf32>
    %2 = tpu.matmul %0, %1, %cst {dimension_numbers = #tpu.dot_dimension_numbers<[1], [0], [0], [1], [0, 0, 1, 1], [], []>} : vector<32x192xf32>, vector<192x128xf32>, vector<32x128xf32> -> vector<32x128xf32>
    %c192 = arith.constant 192 : index
    %c0_3 = arith.constant 0 : index
    %3 = vector.load %arg1[%c192, %c0_3] : memref<592x128xf32, #tpu.memory_space<vmem>>, vector<1x128xf32>
    %4 = vector.broadcast %3 : vector<1x128xf32> to vector<32x128xf32>
    %5 = arith.addf %2, %4 : vector<32x128xf32>
    %cst_4 = arith.constant 0.000000e+00 : f32
    %6 = vector.broadcast %cst_4 : f32 to vector<32x128xf32>
    %7 = arith.maximumf %5, %6 : vector<32x128xf32>
    %c31_i32 = arith.constant 31 : i32
    %8 = tpu.dynamic_rotate %7 by %c31_i32 dim 0 : vector<32x128xf32>, i32 -> vector<32x128xf32>
    %9 = arith.maximumf %7, %8 : vector<32x128xf32>
    %c120_i32 = arith.constant 120 : i32
    %10 = tpu.dynamic_rotate %9 by %c120_i32 dim 1 : vector<32x128xf32>, i32 -> vector<32x128xf32>
    %11 = arith.maximumf %9, %10 : vector<32x128xf32>
    %c200 = arith.constant 200 : index
    %c0_5 = arith.constant 0 : index
    %12 = vector.load %arg1[%c200, %c0_5] : memref<592x128xf32, #tpu.memory_space<vmem>>, vector<128x128xf32>
    %cst_6 = arith.constant dense<0.000000e+00> : vector<32x128xf32>
    %13 = tpu.matmul %11, %12, %cst_6 {dimension_numbers = #tpu.dot_dimension_numbers<[1], [0], [0], [1], [0, 0, 1, 1], [], []>} : vector<32x128xf32>, vector<128x128xf32>, vector<32x128xf32> -> vector<32x128xf32>
    %c328 = arith.constant 328 : index
    %c0_7 = arith.constant 0 : index
    %14 = vector.load %arg1[%c328, %c0_7] : memref<592x128xf32, #tpu.memory_space<vmem>>, vector<128x128xf32>
    %cst_8 = arith.constant dense<0.000000e+00> : vector<32x128xf32>
    %15 = tpu.matmul %11, %14, %cst_8 {dimension_numbers = #tpu.dot_dimension_numbers<[1], [0], [0], [1], [0, 0, 1, 1], [], []>} : vector<32x128xf32>, vector<128x128xf32>, vector<32x128xf32> -> vector<32x128xf32>
    %c30_i32 = arith.constant 30 : i32
    %16 = tpu.dynamic_rotate %15 by %c30_i32 dim 0 : vector<32x128xf32>, i32 -> vector<32x128xf32>
    %17 = arith.addf %13, %16 : vector<32x128xf32>
    %c456 = arith.constant 456 : index
    %c0_9 = arith.constant 0 : index
    %18 = vector.load %arg1[%c456, %c0_9] : memref<592x128xf32, #tpu.memory_space<vmem>>, vector<128x128xf32>
    %cst_10 = arith.constant dense<0.000000e+00> : vector<32x128xf32>
    %19 = tpu.matmul %11, %18, %cst_10 {dimension_numbers = #tpu.dot_dimension_numbers<[1], [0], [0], [1], [0, 0, 1, 1], [], []>} : vector<32x128xf32>, vector<128x128xf32>, vector<32x128xf32> -> vector<32x128xf32>
    %c28_i32 = arith.constant 28 : i32
    %20 = tpu.dynamic_rotate %19 by %c28_i32 dim 0 : vector<32x128xf32>, i32 -> vector<32x128xf32>
    %21 = arith.addf %17, %20 : vector<32x128xf32>
    %c584 = arith.constant 584 : index
    %c0_11 = arith.constant 0 : index
    %22 = vector.load %arg1[%c584, %c0_11] : memref<592x128xf32, #tpu.memory_space<vmem>>, vector<1x128xf32>
    %23 = vector.broadcast %22 : vector<1x128xf32> to vector<32x128xf32>
    %24 = arith.addf %21, %23 : vector<32x128xf32>
    %cst_12 = arith.constant 0.000000e+00 : f32
    %25 = vector.broadcast %cst_12 : f32 to vector<32x128xf32>
    %26 = arith.maximumf %24, %25 : vector<32x128xf32>
    %c30_i32_13 = arith.constant 30 : i32
    %27 = tpu.dynamic_rotate %26 by %c30_i32_13 dim 0 : vector<32x128xf32>, i32 -> vector<32x128xf32>
    %28 = arith.maximumf %26, %27 : vector<32x128xf32>
    %c120_i32_14 = arith.constant 120 : i32
    %29 = tpu.dynamic_rotate %28 by %c120_i32_14 dim 1 : vector<32x128xf32>, i32 -> vector<32x128xf32>
    %30 = arith.maximumf %28, %29 : vector<32x128xf32>
    %c0_15 = arith.constant 0 : index
    %c0_16 = arith.constant 0 : index
    %31 = vector.load %arg2[%c0_15, %c0_16] : memref<32x128xf32, #tpu.memory_space<vmem>>, vector<32x128xf32>
    tpu.vector_store %arg2[%c0_15, %c0_16], %30 {strides = array<i32>} : memref<32x128xf32, #tpu.memory_space<vmem>>, vector<32x128xf32>,
    return
  }
}

</mosaic_0001>

<llo_original>
// kernel: tile.13
$region0: #{tile.13}
  #allocation0 [shape = 's32[1]{0}', space=sflag, size = 0x4, scoped, tag = 'scoped memory for tile.13']
  %s0 = inlined_call_operand.vmem [shape: f32[8], index: 0, kind: input, shape index: {}]
  %s1 = inlined_call_operand.vmem [shape: f32[16,8], index: 1, kind: output, shape index: {}]
  // Predicated region
  $region2: #{tile.13} parent=0 // pred_check
    _
  $region3: #{tile.13} parent=0 // pred_check_branch
    %3 = sbr.rel (0) target = $region5
  $region4: #{tile.13} parent=0 // pred_region
    _
  $region5: #{tile.13} parent=0 // pred_fallthru
    _
  %v4 = vld [vmem:[%s0] ss:$0 sm:$0xff]
  %5 = vst [vmem:[%s1] sm:$0xff] %v4
  %s6 = scalar_lea.vmem %s1, 8
  %7 = vst [vmem:[%s6] sm:$0xff] %v4

// kernel: tile.14
$region0: #{tile.14}
  %s0 = inlined_call_operand.vmem [shape: f32[16,8], index: 0, kind: input, shape index: {}]
  %s1 = inlined_call_operand.vmem [shape: f32[1,128], index: 1, kind: output, shape index: {}]
  $region1: #{tile.14} parent=0
    #allocation0 [shape = 'u8[4096]{0}', space=vmem, size = 0x1000, scoped, tag = 'scoped mem for output reshape']
    %v2 = vld [vmem:[%s0] sm:$0x1]
    %vm3 = vcmask 64512
    %4 = vst.msk [vmem:[#allocation0] sm:$0x1] %vm3, %v2
    %s5 = scalar_lea.vmem %s0, 15
    %v6 = vld [vmem:[%s5] sm:$0x1]
    %7 = vrot.lane.b32.xlu0 %v6, 120
    %v8 = vpop.permute.xlu0 %7
    %vm9 = vcmask 1048512
    %10 = vst.msk [vmem:[#allocation0] sm:$0x1] %vm9, %v8
    %s11 = scalar_lea.vmem %s0, 14
    %v12 = vld [vmem:[%s11] sm:$0x1]
    %13 = vrot.lane.b32.xlu0 %v12, 112
    %v14 = vpop.permute.xlu0 %13
    %vm15 = vcmask 982912
    %16 = vst.msk [vmem:[#allocation0] sm:$0x1] %vm15, %v14
    %s17 = scalar_lea.vmem %s0, 13
    %v18 = vld [vmem:[%s17] sm:$0x1]
    %19 = vrot.lane.b32.xlu0 %v18, 104
    %v20 = vpop.permute.xlu0 %19
    %vm21 = vcmask 917312
    %22 = vst.msk [vmem:[#allocation0] sm:$0x1] %vm21, %v20
    %s23 = scalar_lea.vmem %s0, 12
    %v24 = vld [vmem:[%s23] sm:$0x1]
    %25 = vrot.lane.b32.xlu0 %v24, 96
    %v26 = vpop.permute.xlu0 %25
    %vm27 = vcmask 851712
    %28 = vst.msk [vmem:[#allocation0] sm:$0x1] %vm27, %v26
    %s29 = scalar_lea.vmem %s0, 11
    %v30 = vld [vmem:[%s29] sm:$0x1]
    %31 = vrot.lane.b32.xlu0 %v30, 88
    %v32 = vpop.permute.xlu0 %31
    %vm33 = vcmask 786112
    %34 = vst.msk [vmem:[#allocation0] sm:$0x1] %vm33, %v32
    %s35 = scalar_lea.vmem %s0, 10
    %v36 = vld [vmem:[%s35] sm:$0x1]
    %37 = vrot.lane.b32.xlu0 %v36, 80
    %v38 = vpop.permute.xlu0 %37
    %vm39 = vcmask 720512
    %40 = vst.msk [vmem:[#allocation0] sm:$0x1] %vm39, %v38
    %s41 = scalar_lea.vmem %s0, 9
    %v42 = vld [vmem:[%s41] sm:$0x1]
    %43 = vrot.lane.b32.xlu0 %v42, 72
    %v44 = vpop.permute.xlu0 %43
    %vm45 = vcmask 654912
    %46 = vst.msk [vmem:[#allocation0] sm:$0x1] %vm45, %v44
    %s47 = scalar_lea.vmem %s0, 8
    %v48 = vld [vmem:[%s47] sm:$0x1]
    %49 = vrot.lane.b32.xlu0 %v48, 64
    %v50 = vpop.permute.xlu0 %49
    %vm51 = vcmask 589312
    %52 = vst.msk [vmem:[#allocation0] sm:$0x1] %vm51, %v50
    %s53 = scalar_lea.vmem %s0, 7
    %v54 = vld [vmem:[%s53] sm:$0x1]
    %55 = vrot.lane.b32.xlu0 %v54, 56
    %v56 = vpop.permute.xlu0 %55
    %vm57 = vcmask 523712
    %58 = vst.msk [vmem:[#allocation0] sm:$0x1] %vm57, %v56
    %s59 = scalar_lea.vmem %s0, 6
    %v60 = vld [vmem:[%s59] sm:$0x1]
    %61 = vrot.lane.b32.xlu0 %v60, 48
    %v62 = vpop.permute.xlu0 %61
    %vm63 = vcmask 458112
    %64 = vst.msk [vmem:[#allocation0] sm:$0x1] %vm63, %v62
    %s65 = scalar_lea.vmem %s0, 5
    %v66 = vld [vmem:[%s65] sm:$0x1]
    %67 = vrot.lane.b32.xlu0 %v66, 40
    %v68 = vpop.permute.xlu0 %67
    %vm69 = vcmask 392512
    %70 = vst.msk [vmem:[#allocation0] sm:$0x1] %vm69, %v68
    %s71 = scalar_lea.vmem %s0, 4
    %v72 = vld [vmem:[%s71] sm:$0x1]
    %73 = vrot.lane.b32.xlu0 %v72, 32
    %v74 = vpop.permute.xlu0 %73
    %vm75 = vcmask 326912
    %76 = vst.msk [vmem:[#allocation0] sm:$0x1] %vm75, %v74
    %s77 = scalar_lea.vmem %s0, 3
    %v78 = vld [vmem:[%s77] sm:$0x1]
    %79 = vrot.lane.b32.xlu0 %v78, 24
    %v80 = vpop.permute.xlu0 %79
    %vm81 = vcmask 261312
    %82 = vst.msk [vmem:[#allocation0] sm:$0x1] %vm81, %v80
    %s83 = scalar_lea.vmem %s0, 2
    %v84 = vld [vmem:[%s83] sm:$0x1]
    %85 = vrot.lane.b32.xlu0 %v84, 16
    %v86 = vpop.permute.xlu0 %85
    %vm87 = vcmask 195712
    %88 = vst.msk [vmem:[#allocation0] sm:$0x1] %vm87, %v86
    %s89 = scalar_lea.vmem %s0, 1
    %v90 = vld [vmem:[%s89] sm:$0x1]
    %91 = vrot.lane.b32.xlu0 %v90, 8
    %v92 = vpop.permute.xlu0 %91
    %vm93 = vcmask 130112
    %94 = vst.msk [vmem:[#allocation0] sm:$0x1] %vm93, %v92
    %s96 = sshllo.u32 0, 1
    %v98 = vld [vmem:[#allocation0] sm:%s96]
    %s99 = sshllo.u32 0, 1
    %100 = vst [vmem:[%s1] sm:%s99] %v98

// kernel: lenet_forward.1
$region0: #{lenet_forward.1}
  #allocation0 [shape = 'u32[]', space=smem, size = 0x4, offset = 0x4, fixed_abs, tag = 'smem constant byte address 0x4 - core index']
  #allocation1 [shape = 'u32[144,128]{1,0:T(1,128)}', space=vmem, size = 0x12000, scoped, tag = 'internal scratch']
  %s0 = inlined_call_operand.vmem [shape: f32[32,192], index: 0, kind: input, shape index: {}]
  %s1 = inlined_call_operand.vmem [shape: f32[592,128], index: 1, kind: input, shape index: {}]
  %s2 = inlined_call_operand.vmem [shape: f32[32,128], index: 2, kind: output, shape index: {}]
  %s3 = sld [smem:[#allocation0]]
  $region18: #{lenet_forward.1} parent=0
    _
  %s5 = ssub.s32 1, %s3
  %s6 = scalar_select 0, %s5, %s3
  // Predicated region
  $region2: #{lenet_forward.1} parent=0 // pred_check
    _
  $region3: #{lenet_forward.1} parent=0 // pred_check_branch
    %8 = sbr.rel (0) target = $region5
  $region4: #{lenet_forward.1} parent=0 // pred_region
    _
  $region5: #{lenet_forward.1} parent=0 // pred_fallthru
    _
  // Predicated region
  $region6: #{lenet_forward.1} parent=0 // pred_check
    _
  $region7: #{lenet_forward.1} parent=0 // pred_check_branch
    %10 = sbr.rel (0) target = $region9
  $region8: #{lenet_forward.1} parent=0 // pred_region
    _
  $region9: #{lenet_forward.1} parent=0 // pred_fallthru
    _
  %v11 = vld [vmem:[%s0] sm:$0xff]
  %v12 = vld [vmem:[%s0 + $0x8] sm:$0xff]
  %v13 = vld [vmem:[%s0 + $0x10] sm:$0xff]
  %v14 = vld [vmem:[%s0 + $0x18] sm:$0xff]
  %v15 = vld [vmem:[%s0 + $0x20] sm:$0xff]
  %v16 = vld [vmem:[%s0 + $0x28] sm:$0xff]
  %v17 = vld [vmem:[%s0 + $0x30] sm:$0xff]
  %v18 = vld [vmem:[%s0 + $0x38] sm:$0xff]
  %v19 = vld [vmem:[%s1] sm:$0xff]
  %v20 = vld [vmem:[%s1 + $0x8] sm:$0xff]
  %v21 = vld [vmem:[%s1 + $0x10] sm:$0xff]
  %v22 = vld [vmem:[%s1 + $0x18] sm:$0xff]
  %v23 = vld [vmem:[%s1 + $0x20] sm:$0xff]
  %v24 = vld [vmem:[%s1 + $0x28] sm:$0xff]
  %v25 = vld [vmem:[%s1 + $0x30] sm:$0xff]
  %v26 = vld [vmem:[%s1 + $0x38] sm:$0xff]
  %v27 = vld [vmem:[%s1 + $0x40] sm:$0xff]
  %v28 = vld [vmem:[%s1 + $0x48] sm:$0xff]
  %v29 = vld [vmem:[%s1 + $0x50] sm:$0xff]
  %v30 = vld [vmem:[%s1 + $0x58] sm:$0xff]
  %v31 = vld [vmem:[%s1 + $0x60] sm:$0xff]
  %v32 = vld [vmem:[%s1 + $0x68] sm:$0xff]
  %v33 = vld [vmem:[%s1 + $0x70] sm:$0xff]
  %v34 = vld [vmem:[%s1 + $0x78] sm:$0xff]
  %v35 = vld [vmem:[%s1 + $0x80] sm:$0xff]
  %v36 = vld [vmem:[%s1 + $0x88] sm:$0xff]
  %v37 = vld [vmem:[%s1 + $0x90] sm:$0xff]
  %v38 = vld [vmem:[%s1 + $0x98] sm:$0xff]
  %v39 = vld [vmem:[%s1 + $0xa0] sm:$0xff]
  %v40 = vld [vmem:[%s1 + $0xa8] sm:$0xff]
  %v41 = vld [vmem:[%s1 + $0xb0] sm:$0xff]
  %v42 = vld [vmem:[%s1 + $0xb8] sm:$0xff]
  %v43 = vld [vmem:[%s1 + $0xc0] sm:$0x1]
  %v44 = vlaneseq
  %v45 = vshrl.u32 %v44, 7
  %v46 = vsub.s32 0, %v45
  %v47 = vrot.slane %v43, %v46
  %vm48 = vcmask 523264
  %v50 = vsel %vm48, %v12, 0
  %v53 = vsel %vm48, %v14, 0
  %v56 = vsel %vm48, %v16, 0
  %v59 = vsel %vm48, %v18, 0
  %61 = vmatprep.subr.mxu0 0.0
  %62 = vmatpush1.msra.mxu0 %v19
  %63 = vmatprep.subr.mxu0 0.0
  %64 = vmatpush1.msra.mxu0 %v20
  %65 = vmatprep.subr.mxu0 0.0
  %66 = vmatpush1.msra.mxu0 %v21
  %67 = vmatprep.subr.mxu0 0.0
  %68 = vmatpush1.msra.mxu0 %v22
  %69 = vmatprep.subr.mxu0 0.0
  %70 = vmatpush1.msra.mxu0 %v23
  %71 = vmatprep.subr.mxu0 0.0
  %72 = vmatpush1.msra.mxu0 %v24
  %73 = vmatprep.subr.mxu0 0.0
  %74 = vmatpush1.msra.mxu0 %v25
  %75 = vmatprep.subr.mxu0 0.0
  %76 = vmatpush1.msra.mxu0 %v26
  %77 = vmatprep.subr.mxu0 0.0
  %78 = vmatpush1.msra.mxu0 %v27
  %79 = vmatprep.subr.mxu0 0.0
  %80 = vmatpush1.msra.mxu0 %v28
  %81 = vmatprep.subr.mxu0 0.0
  %82 = vmatpush1.msra.mxu0 %v29
  %83 = vmatprep.subr.mxu0 0.0
  %84 = vmatpush1.msra.mxu0 %v30
  %85 = vmatprep.subr.mxu0 0.0
  %86 = vmatpush1.msra.mxu0 %v31
  %87 = vmatprep.subr.mxu0 0.0
  %88 = vmatpush1.msra.mxu0 %v32
  %89 = vmatprep.subr.mxu0 0.0
  %90 = vmatpush1.msra.mxu0 %v33
  %91 = vmatprep.subr.mxu0 0.0
  %92 = vmatpush1.msra.mxu0 %v34
  %93 = vmatprep.subr.mxu0 0.0
  %94 = vmatpush1.msra.mxu0 %v35
  %95 = vmatprep.subr.mxu0 0.0
  %96 = vmatpush1.msra.mxu0 %v36
  %97 = vmatprep.subr.mxu0 0.0
  %98 = vmatpush1.msra.mxu0 %v37
  %99 = vmatprep.subr.mxu0 0.0
  %100 = vmatpush1.msra.mxu0 %v38
  %101 = vmatprep.subr.mxu0 0.0
  %102 = vmatpush1.msra.mxu0 %v39
  %103 = vmatprep.subr.mxu0 0.0
  %104 = vmatpush1.msra.mxu0 %v40
  %105 = vmatprep.subr.mxu0 0.0
  %106 = vmatpush1.msra.mxu0 %v41
  %107 = vmatprep.subr.mxu0 0.0
  %108 = vmatpush1.msra.mxu0 %v42
  %109 = vmatprep.subr.mxu0 0.0
  %110 = vmatpush1.msra.mxu0 0.0
  %111 = vmatprep.subr.mxu0 0.0
  %112 = vmatpush1.msra.mxu0 0.0
  %113 = vmatprep.subr.mxu0 0.0
  %114 = vmatpush1.msra.mxu0 0.0
  %115 = vmatprep.subr.mxu0 0.0
  %116 = vmatpush1.msra.mxu0 0.0
  %117 = vmatprep.subr.mxu0 0.0
  %118 = vmatpush1.msra.mxu0 0.0
  %119 = vmatprep.subr.mxu0 0.0
  %120 = vmatpush1.msra.mxu0 0.0
  %121 = vmatprep.subr.mxu0 0.0
  %122 = vmatpush1.msra.mxu0 0.0
  %123 = vmatprep.subr.mxu0 0.0
  %124 = vmatpush1.msra.mxu0 0.0
  %125 = vmatprep.mubr.f32.mxu0 %v50
  %126 = vmatmul.mubr.f32.gmra.mrb[0].mxu0 %v11
  %v127 = vpop.f32.mrb[0].mxu0
  %v128 = vadd.f32 %v47, %v127
  %v129 = vpop.f32.mrb[0].mxu0
  %130 = vmatprep.mubr.f32.mxu0 %v53
  %131 = vmatmul.mubr.f32.gmra.mrb[0].mxu0 %v13
  %v132 = vpop.f32.mrb[0].mxu0
  %v133 = vadd.f32 %v47, %v132
  %v134 = vpop.f32.mrb[0].mxu0
  %135 = vmatprep.mubr.f32.mxu0 %v56
  %136 = vmatmul.mubr.f32.gmra.mrb[0].mxu0 %v15
  %v137 = vpop.f32.mrb[0].mxu0
  %v138 = vadd.f32 %v47, %v137
  %v139 = vpop.f32.mrb[0].mxu0
  %140 = vmatprep.mubr.f32.mxu0 %v59
  %141 = vmatmul.mubr.f32.gmra.mrb[0].mxu0 %v17
  %v142 = vpop.f32.mrb[0].mxu0
  %v143 = vadd.f32 %v47, %v142
  %v144 = vpop.f32.mrb[0].mxu0
  %145 = vdwg.mxu0
  %v146 = vmax.f32 %v128, 0.0
  %v147 = vmax.f32 %v133, 0.0
  %v148 = vmax.f32 %v138, 0.0
  %v149 = vmax.f32 %v143, 0.0
  %v150 = vrot.slane %v146, 1
  %v151 = vrot.slane %v147, 1
  %v152 = vrot.slane %v148, 1
  %v153 = vrot.slane %v149, 1
  %v154 = vlaneseq
  %v155 = vshrl.u32 %v154, 7
  %vm156 = vcmp.lt.s32.totalorder %v155, 7
  %v157 = vsel %vm156, %v152, %v153
  %v158 = vsel %vm156, %v151, %v152
  %v159 = vsel %vm156, %v150, %v151
  %v160 = vsel %vm156, %v153, %v150
  %v161 = vmax.f32 %v146, %v159
  %v162 = vmax.f32 %v147, %v158
  %v163 = vmax.f32 %v148, %v157
  %v164 = vmax.f32 %v149, %v160
  %165 = vrot.lane.b32.xlu0 %v161, 120
  %v166 = vpop.permute.xlu0 %165
  %167 = vrot.lane.b32.xlu0 %v162, 120
  %v168 = vpop.permute.xlu0 %167
  %169 = vrot.lane.b32.xlu0 %v163, 120
  %v170 = vpop.permute.xlu0 %169
  %171 = vrot.lane.b32.xlu0 %v164, 120
  %v172 = vpop.permute.xlu0 %171
  %v173 = vmax.f32 %v161, %v166
  %v174 = vmax.f32 %v162, %v168
  %v175 = vmax.f32 %v163, %v170
  %v176 = vmax.f32 %v164, %v172
  %v177 = vld [vmem:[%s1 + $0xc8] sm:$0xff]
  %v178 = vld [vmem:[%s1 + $0xd0] sm:$0xff]
  %v179 = vld [vmem:[%s1 + $0xd8] sm:$0xff]
  %v180 = vld [vmem:[%s1 + $0xe0] sm:$0xff]
  %v181 = vld [vmem:[%s1 + $0xe8] sm:$0xff]
  %v182 = vld [vmem:[%s1 + $0xf0] sm:$0xff]
  %v183 = vld [vmem:[%s1 + $0xf8] sm:$0xff]
  %v184 = vld [vmem:[%s1 + $0x100] sm:$0xff]
  %v185 = vld [vmem:[%s1 + $0x108] sm:$0xff]
  %v186 = vld [vmem:[%s1 + $0x110] sm:$0xff]
  %v187 = vld [vmem:[%s1 + $0x118] sm:$0xff]
  %v188 = vld [vmem:[%s1 + $0x120] sm:$0xff]
  %v189 = vld [vmem:[%s1 + $0x128] sm:$0xff]
  %v190 = vld [vmem:[%s1 + $0x130] sm:$0xff]
  %v191 = vld [vmem:[%s1 + $0x138] sm:$0xff]
  %v192 = vld [vmem:[%s1 + $0x140] sm:$0xff]
  %v193 = vld [vmem:[%s1 + $0x148] sm:$0xff]
  %v194 = vld [vmem:[%s1 + $0x150] sm:$0xff]
  %v195 = vld [vmem:[%s1 + $0x158] sm:$0xff]
  %v196 = vld [vmem:[%s1 + $0x160] sm:$0xff]
  %v197 = vld [vmem:[%s1 + $0x168] sm:$0xff]
  %v198 = vld [vmem:[%s1 + $0x170] sm:$0xff]
  %v199 = vld [vmem:[%s1 + $0x178] sm:$0xff]
  %v200 = vld [vmem:[%s1 + $0x180] sm:$0xff]
  %v201 = vld [vmem:[%s1 + $0x188] sm:$0xff]
  %v202 = vld [vmem:[%s1 + $0x190] sm:$0xff]
  %v203 = vld [vmem:[%s1 + $0x198] sm:$0xff]
  %v204 = vld [vmem:[%s1 + $0x1a0] sm:$0xff]
  %v205 = vld [vmem:[%s1 + $0x1a8] sm:$0xff]
  %v206 = vld [vmem:[%s1 + $0x1b0] sm:$0xff]
  %v207 = vld [vmem:[%s1 + $0x1b8] sm:$0xff]
  %v208 = vld [vmem:[%s1 + $0x1c0] sm:$0xff]
  %209 = vmatprep.subr.mxu0 0.0
  %210 = vmatpush1.msra.mxu0 %v193
  %211 = vmatprep.subr.mxu0 0.0
  %212 = vmatpush1.msra.mxu0 %v194
  %213 = vmatprep.subr.mxu0 0.0
  %214 = vmatpush1.msra.mxu0 %v195
  %215 = vmatprep.subr.mxu0 0.0
  %216 = vmatpush1.msra.mxu0 %v196
  %217 = vmatprep.subr.mxu0 0.0
  %218 = vmatpush1.msra.mxu0 %v197
  %219 = vmatprep.subr.mxu0 0.0
  %220 = vmatpush1.msra.mxu0 %v198
  %221 = vmatprep.subr.mxu0 0.0
  %222 = vmatpush1.msra.mxu0 %v199
  %223 = vmatprep.subr.mxu0 0.0
  %224 = vmatpush1.msra.mxu0 %v200
  %225 = vmatprep.subr.mxu0 0.0
  %226 = vmatpush1.msra.mxu0 %v201
  %227 = vmatprep.subr.mxu0 0.0
  %228 = vmatpush1.msra.mxu0 %v202
  %229 = vmatprep.subr.mxu0 0.0
  %230 = vmatpush1.msra.mxu0 %v203
  %231 = vmatprep.subr.mxu0 0.0
  %232 = vmatpush1.msra.mxu0 %v204
  %233 = vmatprep.subr.mxu0 0.0
  %234 = vmatpush1.msra.mxu0 %v205
  %235 = vmatprep.subr.mxu0 0.0
  %236 = vmatpush1.msra.mxu0 %v206
  %237 = vmatprep.subr.mxu0 0.0
  %238 = vmatpush1.msra.mxu0 %v207
  %239 = vmatprep.subr.mxu0 0.0
  %240 = vmatpush1.msra.mxu0 %v208
  %241 = vmatprep.subr.mxu0 0.0
  %242 = vmatpush1.msra.mxu0 0.0
  %243 = vmatprep.subr.mxu0 0.0
  %244 = vmatpush1.msra.mxu0 0.0
  %245 = vmatprep.subr.mxu0 0.0
  %246 = vmatpush1.msra.mxu0 0.0
  %247 = vmatprep.subr.mxu0 0.0
  %248 = vmatpush1.msra.mxu0 0.0
  %249 = vmatprep.subr.mxu0 0.0
  %250 = vmatpush1.msra.mxu0 0.0
  %251 = vmatprep.subr.mxu0 0.0
  %252 = vmatpush1.msra.mxu0 0.0
  %253 = vmatprep.subr.mxu0 0.0
  %254 = vmatpush1.msra.mxu0 0.0
  %255 = vmatprep.subr.mxu0 0.0
  %256 = vmatpush1.msra.mxu0 0.0
  %257 = vmatprep.subr.mxu0 0.0
  %258 = vmatpush1.msra.mxu0 0.0
  %259 = vmatprep.subr.mxu0 0.0
  %260 = vmatpush1.msra.mxu0 0.0
  %261 = vmatprep.subr.mxu0 0.0
  %262 = vmatpush1.msra.mxu0 0.0
  %263 = vmatprep.subr.mxu0 0.0
  %264 = vmatpush1.msra.mxu0 0.0
  %265 = vmatprep.subr.mxu0 0.0
  %266 = vmatpush1.msra.mxu0 0.0
  %267 = vmatprep.subr.mxu0 0.0
  %268 = vmatpush1.msra.mxu0 0.0
  %269 = vmatprep.subr.mxu0 0.0
  %270 = vmatpush1.msra.mxu0 0.0
  %271 = vmatprep.subr.mxu0 0.0
  %272 = vmatpush1.msra.mxu0 0.0
  %273 = vmatprep.mubr.f32.mxu0 0.0
  %274 = vmatmul.mubr.f32.gmra.mrb[0].mxu0 %v173
  %v275 = vpop.f32.mrb[0].mxu0
  %v276 = vadd.f32 0.0, %v275
  %v277 = vpop.f32.mrb[0].mxu0
  %278 = vmatprep.mubr.f32.mxu0 0.0
  %279 = vmatmul.mubr.f32.gmra.mrb[0].mxu0 %v174
  %v280 = vpop.f32.mrb[0].mxu0
  %v281 = vadd.f32 0.0, %v280
  %v282 = vpop.f32.mrb[0].mxu0
  %283 = vmatprep.mubr.f32.mxu0 0.0
  %284 = vmatmul.mubr.f32.gmra.mrb[0].mxu0 %v175
  %v285 = vpop.f32.mrb[0].mxu0
  %v286 = vadd.f32 0.0, %v285
  %v287 = vpop.f32.mrb[0].mxu0
  %288 = vmatprep.mubr.f32.mxu0 0.0
  %289 = vmatmul.mubr.f32.gmra.mrb[0].mxu0 %v176
  %v290 = vpop.f32.mrb[0].mxu0
  %v291 = vadd.f32 0.0, %v290
  %v292 = vpop.f32.mrb[0].mxu0
  %293 = vdwg.mxu0
  %v294 = vrot.slane %v276, 2
  %v295 = vrot.slane %v281, 2
  %v296 = vrot.slane %v286, 2
  %v297 = vrot.slane %v291, 2
  %vm298 = vcmp.lt.s32.totalorder %v155, 6
  %v299 = vsel %vm298, %v296, %v297
  %v300 = vsel %vm298, %v295, %v296
  %v301 = vsel %vm298, %v294, %v295
  %v302 = vsel %vm298, %v297, %v294
  %303 = vmatprep.subr.mxu0 0.0
  %304 = vmatpush1.msra.mxu0 %v177
  %305 = vmatprep.subr.mxu0 0.0
  %306 = vmatpush1.msra.mxu0 %v178
  %307 = vmatprep.subr.mxu0 0.0
  %308 = vmatpush1.msra.mxu0 %v179
  %309 = vmatprep.subr.mxu0 0.0
  %310 = vmatpush1.msra.mxu0 %v180
  %311 = vmatprep.subr.mxu0 0.0
  %312 = vmatpush1.msra.mxu0 %v181
  %313 = vmatprep.subr.mxu0 0.0
  %314 = vmatpush1.msra.mxu0 %v182
  %315 = vmatprep.subr.mxu0 0.0
  %316 = vmatpush1.msra.mxu0 %v183
  %317 = vmatprep.subr.mxu0 0.0
  %318 = vmatpush1.msra.mxu0 %v184
  %319 = vmatprep.subr.mxu0 0.0
  %320 = vmatpush1.msra.mxu0 %v185
  %321 = vmatprep.subr.mxu0 0.0
  %322 = vmatpush1.msra.mxu0 %v186
  %323 = vmatprep.subr.mxu0 0.0
  %324 = vmatpush1.msra.mxu0 %v187
  %325 = vmatprep.subr.mxu0 0.0
  %326 = vmatpush1.msra.mxu0 %v188
  %327 = vmatprep.subr.mxu0 0.0
  %328 = vmatpush1.msra.mxu0 %v189
  %329 = vmatprep.subr.mxu0 0.0
  %330 = vmatpush1.msra.mxu0 %v190
  %331 = vmatprep.subr.mxu0 0.0
  %332 = vmatpush1.msra.mxu0 %v191
  %333 = vmatprep.subr.mxu0 0.0
  %334 = vmatpush1.msra.mxu0 %v192
  %335 = vmatprep.subr.mxu0 0.0
  %336 = vmatpush1.msra.mxu0 0.0
  %337 = vmatprep.subr.mxu0 0.0
  %338 = vmatpush1.msra.mxu0 0.0
  %339 = vmatprep.subr.mxu0 0.0
  %340 = vmatpush1.msra.mxu0 0.0
  %341 = vmatprep.subr.mxu0 0.0
  %342 = vmatpush1.msra.mxu0 0.0
  %343 = vmatprep.subr.mxu0 0.0
  %344 = vmatpush1.msra.mxu0 0.0
  %345 = vmatprep.subr.mxu0 0.0
  %346 = vmatpush1.msra.mxu0 0.0
  %347 = vmatprep.subr.mxu0 0.0
  %348 = vmatpush1.msra.mxu0 0.0
  %349 = vmatprep.subr.mxu0 0.0
  %350 = vmatpush1.msra.mxu0 0.0
  %351 = vmatprep.subr.mxu0 0.0
  %352 = vmatpush1.msra.mxu0 0.0
  %353 = vmatprep.subr.mxu0 0.0
  %354 = vmatpush1.msra.mxu0 0.0
  %355 = vmatprep.subr.mxu0 0.0
  %356 = vmatpush1.msra.mxu0 0.0
  %357 = vmatprep.subr.mxu0 0.0
  %358 = vmatpush1.msra.mxu0 0.0
  %359 = vmatprep.subr.mxu0 0.0
  %360 = vmatpush1.msra.mxu0 0.0
  %361 = vmatprep.subr.mxu0 0.0
  %362 = vmatpush1.msra.mxu0 0.0
  %363 = vmatprep.subr.mxu0 0.0
  %364 = vmatpush1.msra.mxu0 0.0
  %365 = vmatprep.subr.mxu0 0.0
  %366 = vmatpush1.msra.mxu0 0.0
  %367 = vmatprep.mubr.f32.mxu0 0.0
  %368 = vmatmul.mubr.f32.gmra.mrb[0].mxu0 %v173
  %v369 = vpop.f32.mrb[0].mxu0
  %v370 = vadd.f32 %v301, %v369
  %v371 = vpop.f32.mrb[0].mxu0
  %372 = vmatprep.mubr.f32.mxu0 0.0
  %373 = vmatmul.mubr.f32.gmra.mrb[0].mxu0 %v174
  %v374 = vpop.f32.mrb[0].mxu0
  %v375 = vadd.f32 %v300, %v374
  %v376 = vpop.f32.mrb[0].mxu0
  %377 = vmatprep.mubr.f32.mxu0 0.0
  %378 = vmatmul.mubr.f32.gmra.mrb[0].mxu0 %v175
  %v379 = vpop.f32.mrb[0].mxu0
  %v380 = vadd.f32 %v299, %v379
  %v381 = vpop.f32.mrb[0].mxu0
  %382 = vmatprep.mubr.f32.mxu0 0.0
  %383 = vmatmul.mubr.f32.gmra.mrb[0].mxu0 %v176
  %v384 = vpop.f32.mrb[0].mxu0
  %v385 = vadd.f32 %v302, %v384
  %v386 = vpop.f32.mrb[0].mxu0
  %387 = vdwg.mxu0
  %v388 = vld [vmem:[%s1 + $0x1c8] sm:$0xff]
  %v389 = vld [vmem:[%s1 + $0x1d0] sm:$0xff]
  %v390 = vld [vmem:[%s1 + $0x1d8] sm:$0xff]
  %v391 = vld [vmem:[%s1 + $0x1e0] sm:$0xff]
  %v392 = vld [vmem:[%s1 + $0x1e8] sm:$0xff]
  %v393 = vld [vmem:[%s1 + $0x1f0] sm:$0xff]
  %v394 = vld [vmem:[%s1 + $0x1f8] sm:$0xff]
  %v395 = vld [vmem:[%s1 + $0x200] sm:$0xff]
  %v396 = vld [vmem:[%s1 + $0x208] sm:$0xff]
  %v397 = vld [vmem:[%s1 + $0x210] sm:$0xff]
  %v398 = vld [vmem:[%s1 + $0x218] sm:$0xff]
  %v399 = vld [vmem:[%s1 + $0x220] sm:$0xff]
  %v400 = vld [vmem:[%s1 + $0x228] sm:$0xff]
  %v401 = vld [vmem:[%s1 + $0x230] sm:$0xff]
  %v402 = vld [vmem:[%s1 + $0x238] sm:$0xff]
  %v403 = vld [vmem:[%s1 + $0x240] sm:$0xff]
  %404 = vmatprep.subr.mxu0 0.0
  %405 = vmatpush1.msra.mxu0 %v388
  %406 = vmatprep.subr.mxu0 0.0
  %407 = vmatpush1.msra.mxu0 %v389
  %408 = vmatprep.subr.mxu0 0.0
  %409 = vmatpush1.msra.mxu0 %v390
  %410 = vmatprep.subr.mxu0 0.0
  %411 = vmatpush1.msra.mxu0 %v391
  %412 = vmatprep.subr.mxu0 0.0
  %413 = vmatpush1.msra.mxu0 %v392
  %414 = vmatprep.subr.mxu0 0.0
  %415 = vmatpush1.msra.mxu0 %v393
  %416 = vmatprep.subr.mxu0 0.0
  %417 = vmatpush1.msra.mxu0 %v394
  %418 = vmatprep.subr.mxu0 0.0
  %419 = vmatpush1.msra.mxu0 %v395
  %420 = vmatprep.subr.mxu0 0.0
  %421 = vmatpush1.msra.mxu0 %v396
  %422 = vmatprep.subr.mxu0 0.0
  %423 = vmatpush1.msra.mxu0 %v397
  %424 = vmatprep.subr.mxu0 0.0
  %425 = vmatpush1.msra.mxu0 %v398
  %426 = vmatprep.subr.mxu0 0.0
  %427 = vmatpush1.msra.mxu0 %v399
  %428 = vmatprep.subr.mxu0 0.0
  %429 = vmatpush1.msra.mxu0 %v400
  %430 = vmatprep.subr.mxu0 0.0
  %431 = vmatpush1.msra.mxu0 %v401
  %432 = vmatprep.subr.mxu0 0.0
  %433 = vmatpush1.msra.mxu0 %v402
  %434 = vmatprep.subr.mxu0 0.0
  %435 = vmatpush1.msra.mxu0 %v403
  %436 = vmatprep.subr.mxu0 0.0
  %437 = vmatpush1.msra.mxu0 0.0
  %438 = vmatprep.subr.mxu0 0.0
  %439 = vmatpush1.msra.mxu0 0.0
  %440 = vmatprep.subr.mxu0 0.0
  %441 = vmatpush1.msra.mxu0 0.0
  %442 = vmatprep.subr.mxu0 0.0
  %443 = vmatpush1.msra.mxu0 0.0
  %444 = vmatprep.subr.mxu0 0.0
  %445 = vmatpush1.msra.mxu0 0.0
  %446 = vmatprep.subr.mxu0 0.0
  %447 = vmatpush1.msra.mxu0 0.0
  %448 = vmatprep.subr.mxu0 0.0
  %449 = vmatpush1.msra.mxu0 0.0
  %450 = vmatprep.subr.mxu0 0.0
  %451 = vmatpush1.msra.mxu0 0.0
  %452 = vmatprep.subr.mxu0 0.0
  %453 = vmatpush1.msra.mxu0 0.0
  %454 = vmatprep.subr.mxu0 0.0
  %455 = vmatpush1.msra.mxu0 0.0
  %456 = vmatprep.subr.mxu0 0.0
  %457 = vmatpush1.msra.mxu0 0.0
  %458 = vmatprep.subr.mxu0 0.0
  %459 = vmatpush1.msra.mxu0 0.0
  %460 = vmatprep.subr.mxu0 0.0
  %461 = vmatpush1.msra.mxu0 0.0
  %462 = vmatprep.subr.mxu0 0.0
  %463 = vmatpush1.msra.mxu0 0.0
  %464 = vmatprep.subr.mxu0 0.0
  %465 = vmatpush1.msra.mxu0 0.0
  %466 = vmatprep.subr.mxu0 0.0
  %467 = vmatpush1.msra.mxu0 0.0
  %468 = vmatprep.mubr.f32.mxu0 0.0
  %469 = vmatmul.mubr.f32.gmra.mrb[0].mxu0 %v173
  %v470 = vpop.f32.mrb[0].mxu0
  %v471 = vadd.f32 0.0, %v470
  %v472 = vpop.f32.mrb[0].mxu0
  %473 = vmatprep.mubr.f32.mxu0 0.0
  %474 = vmatmul.mubr.f32.gmra.mrb[0].mxu0 %v174
  %v475 = vpop.f32.mrb[0].mxu0
  %v476 = vadd.f32 0.0, %v475
  %v477 = vpop.f32.mrb[0].mxu0
  %478 = vmatprep.mubr.f32.mxu0 0.0
  %479 = vmatmul.mubr.f32.gmra.mrb[0].mxu0 %v175
  %v480 = vpop.f32.mrb[0].mxu0
  %v481 = vadd.f32 0.0, %v480
  %v482 = vpop.f32.mrb[0].mxu0
  %483 = vmatprep.mubr.f32.mxu0 0.0
  %484 = vmatmul.mubr.f32.gmra.mrb[0].mxu0 %v176
  %v485 = vpop.f32.mrb[0].mxu0
  %v486 = vadd.f32 0.0, %v485
  %v487 = vpop.f32.mrb[0].mxu0
  %488 = vdwg.mxu0
  %v489 = vrot.slane %v471, 4
  %v490 = vrot.slane %v476, 4
  %v491 = vrot.slane %v481, 4
  %v492 = vrot.slane %v486, 4
  %vm493 = vcmp.lt.s32.totalorder %v155, 4
  %v494 = vsel %vm493, %v491, %v492
  %v495 = vsel %vm493, %v490, %v491
  %v496 = vsel %vm493, %v489, %v490
  %v497 = vsel %vm493, %v492, %v489
  %v498 = vadd.f32 %v370, %v496
  %v499 = vadd.f32 %v375, %v495
  %v500 = vadd.f32 %v380, %v494
  %v501 = vadd.f32 %v385, %v497
  %v502 = vld [vmem:[%s1 + $0x248] sm:$0x1]
  %v503 = vlaneseq
  %v504 = vshrl.u32 %v503, 7
  %v505 = vsub.s32 0, %v504
  %v506 = vrot.slane %v502, %v505
  %v507 = vadd.f32 %v498, %v506
  %v508 = vadd.f32 %v499, %v506
  %v509 = vadd.f32 %v500, %v506
  %v510 = vadd.f32 %v501, %v506
  %v511 = vmax.f32 %v507, 0.0
  %v512 = vmax.f32 %v508, 0.0
  %v513 = vmax.f32 %v509, 0.0
  %v514 = vmax.f32 %v510, 0.0
  %v515 = vrot.slane %v511, 2
  %v516 = vrot.slane %v512, 2
  %v517 = vrot.slane %v513, 2
  %v518 = vrot.slane %v514, 2
  %v519 = vsel %vm298, %v517, %v518
  %v520 = vsel %vm298, %v516, %v517
  %v521 = vsel %vm298, %v515, %v516
  %v522 = vsel %vm298, %v518, %v515
  %v523 = vmax.f32 %v511, %v521
  %v524 = vmax.f32 %v512, %v520
  %v525 = vmax.f32 %v513, %v519
  %v526 = vmax.f32 %v514, %v522
  %527 = vrot.lane.b32.xlu0 %v523, 120
  %v528 = vpop.permute.xlu0 %527
  %529 = vrot.lane.b32.xlu0 %v524, 120
  %v530 = vpop.permute.xlu0 %529
  %531 = vrot.lane.b32.xlu0 %v525, 120
  %v532 = vpop.permute.xlu0 %531
  %533 = vrot.lane.b32.xlu0 %v526, 120
  %v534 = vpop.permute.xlu0 %533
  %v535 = vmax.f32 %v523, %v528
  %v536 = vmax.f32 %v524, %v530
  %v537 = vmax.f32 %v525, %v532
  %v538 = vmax.f32 %v526, %v534
  %539 = vst [vmem:[%s2] sm:$0xff] %v535
  %540 = vst [vmem:[%s2 + $0x8] sm:$0xff] %v536
  %541 = vst [vmem:[%s2 + $0x10] sm:$0xff] %v537
  %542 = vst [vmem:[%s2 + $0x18] sm:$0xff] %v538
  // Predicated region
  $region10: #{lenet_forward.1} parent=0 // pred_check
    _
  $region11: #{lenet_forward.1} parent=0 // pred_check_branch
    %544 = sbr.rel (0) target = $region13
  $region12: #{lenet_forward.1} parent=0 // pred_region
    _
  $region13: #{lenet_forward.1} parent=0 // pred_fallthru
    _
  // Predicated region
  $region14: #{lenet_forward.1} parent=0 // pred_check
    _
  $region15: #{lenet_forward.1} parent=0 // pred_check_branch
    %546 = sbr.rel (0) target = $region17
  $region16: #{lenet_forward.1} parent=0 // pred_region
    _
  $region17: #{lenet_forward.1} parent=0 // pred_fallthru
    _

</llo_original>
